<compile_context>
chip_gen: v7x
topology: tpu7x:2x2x1
jax: 0.10.0
libtpu: 0.0.40
codegen_flags: <defaults>
</compile_context>

<pallas_src>
import functools

import numpy as np
import jax
import jax.numpy as jnp
from jax import lax
from jax.experimental import pallas as pl
from jax.experimental.pallas import tpu as pltpu


def _round_up(x, m):
    return (x + m - 1) // m * m


# ---------------------------------------------------------------------------
# Stage 1: distances + label/margin folding (computed once, un-gridded).
# ---------------------------------------------------------------------------
def _dist_fold_kernel(emb_ref, lab_ref, *out_refs, n_valid, margin_add,
                      fill_thr, fill_an, squared, l2_normalize):
    """emb_ref: (Npad, Dpad) f32, lab_ref: (Npad, 1) i32 (padded rows = -1).

    out_refs[0] (thr): (Npad, Npad) f32  mat + margin_add where sames else fill_thr
    out_refs[1] (an) : (Npad, Npad) f32  mat where diffs else fill_an
    out_refs[2] (lo) : (Npad, Npad) f32  mat where sames else +inf   (semi-hard only)
    """
    thr_ref, an_ref = out_refs[0], out_refs[1]
    lo_ref = out_refs[2] if len(out_refs) > 2 else None

    e = emb_ref[...]
    npad = e.shape[0]

    if l2_normalize:
        e = e * lax.rsqrt(jnp.sum(e * e, axis=1, keepdims=True) + 1e-12)

    sq = jnp.sum(e * e, axis=1, keepdims=True)                      # (Npad, 1)
    gram = lax.dot_general(e, e,                                    # MXU, no transpose
                           dimension_numbers=(((1,), (1,)), ((), ())),
                           preferred_element_type=jnp.float32)
    d2 = jnp.maximum(sq + sq.T - 2.0 * gram, 0.0)
    mat = d2 if squared else jnp.sqrt(d2)

    lab = lab_ref[...]                                              # (Npad, 1)
    eq = lab == lab.T                                               # (Npad, Npad)
    # Small 1-D iotas only (no full (Npad,Npad) int32 iota arrays).
    row = lax.broadcasted_iota(jnp.int32, (npad, 1), 0)
    col = lax.broadcasted_iota(jnp.int32, (1, npad), 1)
    real = jnp.logical_and(row < n_valid, col < n_valid)            # broadcasts
    sames = jnp.logical_and(jnp.logical_and(eq, row != col), real)
    diffs = jnp.logical_and(jnp.logical_not(eq), real)

    thr_ref[...] = jnp.where(sames, mat + margin_add, fill_thr)
    an_ref[...] = jnp.where(diffs, mat, fill_an)
    if lo_ref is not None:
        lo_ref[...] = jnp.where(sames, mat, float('inf'))


# ---------------------------------------------------------------------------
# Stage 2: writeback-bound mask kernels (single compare + int8 cast).
# ---------------------------------------------------------------------------
def _mask_kernel_onecmp(thr_ref, an_ref, mask_ref, *, easy):
    """thr_ref/an_ref: (TA, Npad) f32; mask_ref: (TA, Npad, Npad) i8."""
    thr = thr_ref[...][:, :, None]            # (TA, NP, 1)   mat[a,p]+m (masked)
    an = an_ref[...][:, None, :]              # (TA, 1,  NN)  mat[a,n]   (masked)
    cond = (an > thr) if easy else (an <= thr)
    mask_ref[...] = cond.astype(jnp.int8)


def _mask_kernel_semihard(thr_ref, an_ref, lo_ref, mask_ref):
    """semi-hard: ap < an <= ap + margin (masks folded into thr/lo/an)."""
    thr = thr_ref[...][:, :, None]
    lo = lo_ref[...][:, :, None]
    an = an_ref[...][:, None, :]
    mask_ref[...] = jnp.logical_and(an <= thr, an > lo).astype(jnp.int8)


# ---------------------------------------------------------------------------
# Wrapper
# ---------------------------------------------------------------------------
def triplet_margin_miner_mask(embeddings, labels, *, margin=0.2,
                              type_of_triplets='all', squared=True,
                              l2_normalize=False, ta=None):
    """Returns the PADDED dense (Npad, Npad, Npad) int8 selection mask.

    Padded rows/cols are guaranteed zero, so np.nonzero on the padded mask
    yields exactly the triplet indices of the un-padded problem (no crop).
    """
    assert type_of_triplets in ('all', 'hard', 'semi-hard', 'easy')
    # TODO(synk): 2-D (multi-hot) labels path of get_all_triplets_indices
    # (labels @ labels.T > 0) is not implemented; only 1-D labels supported.
    n, d = embeddings.shape

    npad = max(_round_up(n, 128), 128)
    dpad = max(_round_up(d, 128), 128)

    if ta is None:
        ta = 8
        # Keep 2x double-buffered int8 output blocks under ~24 MiB (fits the
        # default scoped VMEM on v5e/v6e/v7x without flag changes).
        while ta > 1 and 2 * ta * npad * npad > 24 * 1024 * 1024:
            ta //= 2
    assert npad % ta == 0

    emb_p = jnp.zeros((npad, dpad), jnp.float32)
    emb_p = emb_p.at[:n, :d].set(embeddings.astype(jnp.float32))
    lab_flat = jnp.asarray(labels).astype(jnp.int32).reshape(-1)
    lab_p = jnp.full((npad, 1), -1, dtype=jnp.int32)
    lab_p = lab_p.at[:n, 0].set(lab_flat)

    easy = type_of_triplets == 'easy'
    semi = type_of_triplets == 'semi-hard'
    margin = float(margin)
    # 'hard' = (an-ap <= margin) & (an-ap <= 0)  ==  an <= ap + min(margin, 0)
    margin_add = min(margin, 0.0) if type_of_triplets == 'hard' else margin
    fill_thr = float('inf') if easy else float('-inf')
    fill_an = float('-inf') if easy else float('inf')

    # --- Stage 1: distances + folded thresholds (one small un-gridded call).
    n_out1 = 3 if semi else 2
    # TODO(synk): for very large N (>= ~2048 on v7x) stage 1 should be
    # row-tiled instead of whole-matrix to stay within VMEM.
    fold_kernel = functools.partial(
        _dist_fold_kernel, n_valid=n, margin_add=margin_add,
        fill_thr=fill_thr, fill_an=fill_an, squared=squared,
        l2_normalize=l2_normalize)
    folded = pl.pallas_call(
        fold_kernel,
        out_shape=tuple(jax.ShapeDtypeStruct((npad, npad), jnp.float32)
                        for _ in range(n_out1)),
        in_specs=[pl.BlockSpec(memory_space=pltpu.MemorySpace.VMEM),
                  pl.BlockSpec(memory_space=pltpu.MemorySpace.VMEM)],
        out_specs=tuple(pl.BlockSpec(memory_space=pltpu.MemorySpace.VMEM)
                        for _ in range(n_out1)),
    )(emb_p, lab_p)

    # --- Stage 2: 1-D grid over anchor tiles, full-row (TA, Npad, Npad) blocks.
    if semi:
        thr, an_m, lo = folded
        kernel2 = _mask_kernel_semihard
        inputs2 = (thr, an_m, lo)
    else:
        thr, an_m = folded
        kernel2 = functools.partial(_mask_kernel_onecmp, easy=easy)
        inputs2 = (thr, an_m)
    in_specs2 = [pl.BlockSpec((ta, npad), lambda a: (a, 0))
                 for _ in range(len(inputs2))]

    cp_kwargs = dict(dimension_semantics=("parallel",))
    out_buf_bytes = 2 * ta * npad * npad               # double-buffered int8 out
    if out_buf_bytes > 24 * 1024 * 1024:
        cp_kwargs["vmem_limit_bytes"] = out_buf_bytes + (8 << 20)

    mask = pl.pallas_call(
        kernel2,
        out_shape=jax.ShapeDtypeStruct((npad, npad, npad), jnp.int8),
        grid_spec=pltpu.PrefetchScalarGridSpec(
            num_scalar_prefetch=0,
            grid=(npad // ta,),
            in_specs=in_specs2,
            out_specs=pl.BlockSpec((ta, npad, npad), lambda a: (a, 0, 0)),
        ),
        compiler_params=pltpu.CompilerParams(**cp_kwargs),
    )(*inputs2)

    return mask  # padded; padded entries are zero by construction


def triplet_margin_miner(embeddings, labels, *, margin=0.2,
                         type_of_triplets='all', squared=True,
                         l2_normalize=False):
    """Full forward: returns (anchor_idx, positive_idx, negative_idx)."""
    mask = triplet_margin_miner_mask(
        embeddings, labels, margin=margin, type_of_triplets=type_of_triplets,
        squared=squared, l2_normalize=l2_normalize)
    # TODO(synk): dynamic-length index output (torch.where) has no static-shape
    # Pallas equivalent; extraction runs on host over the padded int8 mask
    # (padded entries are zero, so indices are identical to the cropped mask).
    mask_np = np.asarray(jax.block_until_ready(mask))
    a_idx, p_idx, n_idx = np.nonzero(mask_np)
    return a_idx, p_idx, n_idx


if __name__ == "__main__":
    # Small deterministic example: N=8 embeddings of dim D=32, 4 classes.
    N, D = 8, 32
    key = jax.random.PRNGKey(0)
    embeddings = jax.random.normal(key, (N, D), dtype=jnp.float32)
    labels = jnp.array([0, 0, 1, 1, 2, 2, 3, 3], dtype=jnp.int32)
    margin = 0.2

    # Pure-numpy reference of the PyTorch module's forward.
    emb_np = np.asarray(embeddings, dtype=np.float32)
    lab_np = np.asarray(labels)
    diff = emb_np[:, None, :] - emb_np[None, :, :]
    mat_ref = (diff * diff).sum(-1)                       # squared euclidean
    same = lab_np[:, None] == lab_np[None, :]
    np.fill_diagonal(same, False)
    diffm = lab_np[:, None] != lab_np[None, :]
    valid = same[:, :, None] & diffm[:, None, :]
    tmarg = mat_ref[:, None, :] - mat_ref[:, :, None]     # an - ap, [a, p, n]

    for tot in ("all", "hard", "semi-hard", "easy"):
        mask = triplet_margin_miner_mask(
            embeddings, labels, margin=margin, type_of_triplets=tot,
            squared=True, l2_normalize=False)
        mask = np.asarray(jax.block_until_ready(mask))

        if tot == 'easy':
            cond = tmarg > margin
        else:
            cond = tmarg <= margin
            if tot == 'hard':
                cond = cond & (tmarg <= 0)
            elif tot == 'semi-hard':
                cond = cond & (tmarg > 0)
        ref_mask = cond & valid

        got = mask[:N, :N, :N] != 0
        assert np.array_equal(got, ref_mask), f"mask mismatch for {tot}"
        # Padded region must contribute nothing.
        assert np.count_nonzero(mask) == np.count_nonzero(got), \
            f"padding not zero for {tot}"

    a_idx, p_idx, n_idx = triplet_margin_miner(
        embeddings, labels, margin=margin, type_of_triplets='all',
        squared=True, l2_normalize=False)
    ra, rp, rn = np.nonzero((tmarg <= margin) & valid)
    assert np.array_equal(a_idx, ra) and np.array_equal(p_idx, rp) \
        and np.array_equal(n_idx, rn)

    print("KERNEL_OK")
</pallas_src>

<mosaic_0001>
module attributes {stable_mosaic.version = 11 : i64} {
  func.func @_dist_fold_kernel(%arg0: memref<128x128xf32, #tpu.memory_space<vmem>>, %arg1: memref<128x1xi32, #tpu.memory_space<vmem>>, %arg2: memref<128x128xf32, #tpu.memory_space<vmem>>, %arg3: memref<128x128xf32, #tpu.memory_space<vmem>>) attributes {dimension_semantics = [], scalar_prefetch = 0 : i64, scratch_operands = 0 : i64, tpu.core_type = #tpu.core_type<tc>} {
    %c0 = arith.constant 0 : index
    %c0_0 = arith.constant 0 : index
    %0 = vector.load %arg0[%c0, %c0_0] : memref<128x128xf32, #tpu.memory_space<vmem>>, vector<128x128xf32>
    %1 = arith.mulf %0, %0 : vector<128x128xf32>
    %cst = arith.constant dense<0.000000e+00> : vector<128xf32>
    %2 = vector.multi_reduction <add>, %1, %cst [1] : vector<128x128xf32> to vector<128xf32>
    %3 = vector.shape_cast %2 : vector<128xf32> to vector<128x1xf32>
    %cst_1 = arith.constant dense<0.000000e+00> : vector<128x128xf32>
    %4 = tpu.matmul %0, %0, %cst_1 {dimension_numbers = #tpu.dot_dimension_numbers<[1], [1], [0], [0], [0, 0, 1, 0], [], []>} : vector<128x128xf32>, vector<128x128xf32>, vector<128x128xf32> -> vector<128x128xf32>
    %5 = tpu.transpose %3, [1, 0] : vector<128x1xf32> -> vector<1x128xf32>
    %6 = vector.broadcast %3 : vector<128x1xf32> to vector<128x128xf32>
    %7 = vector.broadcast %5 : vector<1x128xf32> to vector<128x128xf32>
    %8 = arith.addf %6, %7 : vector<128x128xf32>
    %cst_2 = arith.constant 2.000000e+00 : f32
    %9 = vector.broadcast %cst_2 : f32 to vector<128x128xf32>
    %10 = arith.mulf %9, %4 : vector<128x128xf32>
    %11 = arith.subf %8, %10 : vector<128x128xf32>
    %cst_3 = arith.constant 0.000000e+00 : f32
    %12 = vector.broadcast %cst_3 : f32 to vector<128x128xf32>
    %13 = arith.maximumf %11, %12 : vector<128x128xf32>
    %c0_4 = arith.constant 0 : index
    %c0_5 = arith.constant 0 : index
    %14 = vector.load %arg1[%c0_4, %c0_5] : memref<128x1xi32, #tpu.memory_space<vmem>>, vector<128x1xi32>
    %15 = tpu.transpose %14, [1, 0] : vector<128x1xi32> -> vector<1x128xi32>
    %16 = vector.broadcast %14 : vector<128x1xi32> to vector<128x128xi32>
    %17 = vector.broadcast %15 : vector<1x128xi32> to vector<128x128xi32>
    %18 = arith.cmpi eq, %16, %17 : vector<128x128xi32>
    %19 = tpu.iota {dimensions = array<i32: 0>} : vector<128x1xi32>
    %20 = tpu.iota {dimensions = array<i32: 1>} : vector<1x128xi32>
    %c8_i32 = arith.constant 8 : i32
    %21 = vector.broadcast %c8_i32 : i32 to vector<128x1xi32>
    %22 = arith.cmpi slt, %19, %21 : vector<128x1xi32>
    %c8_i32_6 = arith.constant 8 : i32
    %23 = vector.broadcast %c8_i32_6 : i32 to vector<1x128xi32>
    %24 = arith.cmpi slt, %20, %23 : vector<1x128xi32>
    %25 = vector.broadcast %22 : vector<128x1xi1> to vector<128x128xi1>
    %26 = vector.broadcast %24 : vector<1x128xi1> to vector<128x128xi1>
    %27 = arith.andi %25, %26 : vector<128x128xi1>
    %28 = vector.broadcast %19 : vector<128x1xi32> to vector<128x128xi32>
    %29 = vector.broadcast %20 : vector<1x128xi32> to vector<128x128xi32>
    %30 = arith.cmpi ne, %28, %29 : vector<128x128xi32>
    %31 = arith.andi %18, %30 : vector<128x128xi1>
    %32 = arith.andi %31, %27 : vector<128x128xi1>
    %cst_7 = arith.constant dense<true> : vector<128x128xi1>
    %33 = arith.xori %18, %cst_7 : vector<128x128xi1>
    %34 = arith.andi %33, %27 : vector<128x128xi1>
    %cst_8 = arith.constant 2.000000e-01 : f32
    %35 = vector.broadcast %cst_8 : f32 to vector<128x128xf32>
    %36 = arith.addf %13, %35 : vector<128x128xf32>
    %cst_9 = arith.constant 0xFF800000 : f32
    %37 = vector.broadcast %cst_9 : f32 to vector<128x128xf32>
    %38 = arith.select %32, %36, %37 : vector<128x128xi1>, vector<128x128xf32>
    %c0_10 = arith.constant 0 : index
    %c0_11 = arith.constant 0 : index
    %39 = vector.load %arg2[%c0_10, %c0_11] : memref<128x128xf32, #tpu.memory_space<vmem>>, vector<128x128xf32>
    tpu.vector_store %arg2[%c0_10, %c0_11], %38 {strides = array<i32>} : memref<128x128xf32, #tpu.memory_space<vmem>>, vector<128x128xf32>,
    %cst_12 = arith.constant 0x7F800000 : f32
    %40 = vector.broadcast %cst_12 : f32 to vector<128x128xf32>
    %41 = arith.select %34, %13, %40 : vector<128x128xi1>, vector<128x128xf32>
    %c0_13 = arith.constant 0 : index
    %c0_14 = arith.constant 0 : index
    %42 = vector.load %arg3[%c0_13, %c0_14] : memref<128x128xf32, #tpu.memory_space<vmem>>, vector<128x128xf32>
    tpu.vector_store %arg3[%c0_13, %c0_14], %41 {strides = array<i32>} : memref<128x128xf32, #tpu.memory_space<vmem>>, vector<128x128xf32>,
    return
  }
}

</mosaic_0001>

<llo_original>
// kernel: tpu_custom_call.1
$region0: #{tpu_custom_call.1}
  #allocation0 [shape = 'u32[]', space=smem, size = 0x4, offset = 0x4, fixed_abs, tag = 'smem constant byte address 0x4 - core index']
  #allocation1 [shape = 'u32[144,128]{1,0:T(1,128)}', space=vmem, size = 0x12000, scoped, tag = 'internal scratch']
  %s0 = inlined_call_operand.vmem [shape: f32[128,128], index: 0, kind: input, shape index: {}]
  %s1 = inlined_call_operand.vmem [shape: s32[128,1], index: 1, kind: input, shape index: {}]
  %s2 = inlined_call_operand.hbm [shape: f32[128,128], index: 2, kind: output, shape index: {0}]
  %s3 = inlined_call_operand.hbm [shape: f32[128,128], index: 3, kind: output, shape index: {1}]
  %4 = xla_tuple %s2, %s3
  %s5 = sld [smem:[#allocation0]]
  $region26: #{tpu_custom_call.1} parent=0
    _
  %s7 = ssub.s32 1, %s5
  %s8 = scalar_select 0, %s7, %s5
  $region1: #{tpu_custom_call.1} parent=0
    #allocation2 [shape = 'u8[65536]{0}', space=vmem, size = 0x10000, scoped, tag = 'output window, operand 0, single buffered']
    #allocation3 [shape = 's32[1]{0}', space=sflag, size = 0x4, scoped, tag = 'scoped memory for tpu_custom_call.1']
    #allocation4 [shape = 'u8[65536]{0}', space=vmem, size = 0x10000, scoped, tag = 'output window, operand 1, single buffered']
    #allocation5 [shape = 's32[1]{0}', space=sflag, size = 0x4, scoped, tag = 'scoped memory for tpu_custom_call.1']
    %9 = vsyncpa [#allocation3], 0
    %10 = vsyncpa [#allocation5], 0
    // Predicated region
    $region2: #{tpu_custom_call.1} parent=1 // pred_check
      _
    $region3: #{tpu_custom_call.1} parent=1 // pred_check_branch
      %12 = sbr.rel (0) target = $region5
    $region4: #{tpu_custom_call.1} parent=1 // pred_region
      _
    $region5: #{tpu_custom_call.1} parent=1 // pred_fallthru
      _
    // Predicated region
    $region6: #{tpu_custom_call.1} parent=1 // pred_check
      _
    $region7: #{tpu_custom_call.1} parent=1 // pred_check_branch
      %14 = sbr.rel (0) target = $region9
    $region8: #{tpu_custom_call.1} parent=1 // pred_region
      _
    $region9: #{tpu_custom_call.1} parent=1 // pred_fallthru
      _
    %v15 = vld [vmem:[%s0] sm:$0xff]
    %v16 = vld [vmem:[%s0 + $0x8] sm:$0xff]
    %v17 = vld [vmem:[%s0 + $0x10] sm:$0xff]
    %v18 = vld [vmem:[%s0 + $0x18] sm:$0xff]
    %v19 = vld [vmem:[%s0 + $0x20] sm:$0xff]
    %v20 = vld [vmem:[%s0 + $0x28] sm:$0xff]
    %v21 = vld [vmem:[%s0 + $0x30] sm:$0xff]
    %v22 = vld [vmem:[%s0 + $0x38] sm:$0xff]
    %v23 = vld [vmem:[%s0 + $0x40] sm:$0xff]
    %v24 = vld [vmem:[%s0 + $0x48] sm:$0xff]
    %v25 = vld [vmem:[%s0 + $0x50] sm:$0xff]
    %v26 = vld [vmem:[%s0 + $0x58] sm:$0xff]
    %v27 = vld [vmem:[%s0 + $0x60] sm:$0xff]
    %v28 = vld [vmem:[%s0 + $0x68] sm:$0xff]
    %v29 = vld [vmem:[%s0 + $0x70] sm:$0xff]
    %v30 = vld [vmem:[%s0 + $0x78] sm:$0xff]
    %v31 = vmul.f32 %v15, %v15
    %v32 = vmul.f32 %v16, %v16
    %v33 = vmul.f32 %v17, %v17
    %v34 = vmul.f32 %v18, %v18
    %v35 = vmul.f32 %v19, %v19
    %v36 = vmul.f32 %v20, %v20
    %v37 = vmul.f32 %v21, %v21
    %v38 = vmul.f32 %v22, %v22
    %v39 = vmul.f32 %v23, %v23
    %v40 = vmul.f32 %v24, %v24
    %v41 = vmul.f32 %v25, %v25
    %v42 = vmul.f32 %v26, %v26
    %v43 = vmul.f32 %v27, %v27
    %v44 = vmul.f32 %v28, %v28
    %v45 = vmul.f32 %v29, %v29
    %v46 = vmul.f32 %v30, %v30
    %47 = vadd.xlane.f32.xlu0 %v31
    %v48 = vpop.xlane.xlu0 %47
    %49 = vadd.xlane.f32.xlu0 %v32
    %v50 = vpop.xlane.xlu0 %49
    %51 = vadd.xlane.f32.xlu0 %v33
    %v52 = vpop.xlane.xlu0 %51
    %53 = vadd.xlane.f32.xlu0 %v34
    %v54 = vpop.xlane.xlu0 %53
    %55 = vadd.xlane.f32.xlu0 %v35
    %v56 = vpop.xlane.xlu0 %55
    %57 = vadd.xlane.f32.xlu0 %v36
    %v58 = vpop.xlane.xlu0 %57
    %59 = vadd.xlane.f32.xlu0 %v37
    %v60 = vpop.xlane.xlu0 %59
    %61 = vadd.xlane.f32.xlu0 %v38
    %v62 = vpop.xlane.xlu0 %61
    %63 = vadd.xlane.f32.xlu0 %v39
    %v64 = vpop.xlane.xlu0 %63
    %65 = vadd.xlane.f32.xlu0 %v40
    %v66 = vpop.xlane.xlu0 %65
    %67 = vadd.xlane.f32.xlu0 %v41
    %v68 = vpop.xlane.xlu0 %67
    %69 = vadd.xlane.f32.xlu0 %v42
    %v70 = vpop.xlane.xlu0 %69
    %71 = vadd.xlane.f32.xlu0 %v43
    %v72 = vpop.xlane.xlu0 %71
    %73 = vadd.xlane.f32.xlu0 %v44
    %v74 = vpop.xlane.xlu0 %73
    %75 = vadd.xlane.f32.xlu0 %v45
    %v76 = vpop.xlane.xlu0 %75
    %77 = vadd.xlane.f32.xlu0 %v46
    %v78 = vpop.xlane.xlu0 %77
    %79 = vmatprep.subr.mxu0 0.0
    %80 = vmatpush1.xpose.msra.mxu0 %v15
    %81 = vmatprep.subr.mxu0 0.0
    %82 = vmatpush1.xpose.msra.mxu0 %v16
    %83 = vmatprep.subr.mxu0 0.0
    %84 = vmatpush1.xpose.msra.mxu0 %v17
    %85 = vmatprep.subr.mxu0 0.0
    %86 = vmatpush1.xpose.msra.mxu0 %v18
    %87 = vmatprep.subr.mxu0 0.0
    %88 = vmatpush1.xpose.msra.mxu0 %v19
    %89 = vmatprep.subr.mxu0 0.0
    %90 = vmatpush1.xpose.msra.mxu0 %v20
    %91 = vmatprep.subr.mxu0 0.0
    %92 = vmatpush1.xpose.msra.mxu0 %v21
    %93 = vmatprep.subr.mxu0 0.0
    %94 = vmatpush1.xpose.msra.mxu0 %v22
    %95 = vmatprep.subr.mxu0 0.0
    %96 = vmatpush1.xpose.msra.mxu0 %v23
    %97 = vmatprep.subr.mxu0 0.0
    %98 = vmatpush1.xpose.msra.mxu0 %v24
    %99 = vmatprep.subr.mxu0 0.0
    %100 = vmatpush1.xpose.msra.mxu0 %v25
    %101 = vmatprep.subr.mxu0 0.0
    %102 = vmatpush1.xpose.msra.mxu0 %v26
    %103 = vmatprep.subr.mxu0 0.0
    %104 = vmatpush1.xpose.msra.mxu0 %v27
    %105 = vmatprep.subr.mxu0 0.0
    %106 = vmatpush1.xpose.msra.mxu0 %v28
    %107 = vmatprep.subr.mxu0 0.0
    %108 = vmatpush1.xpose.msra.mxu0 %v29
    %109 = vmatprep.subr.mxu0 0.0
    %110 = vmatpush1.xpose.msra.mxu0 %v30
    %111 = vmatprep.subr.mxu0 0.0
    %112 = vmatpush1.xpose.msra.mxu0 0.0
    %113 = vmatprep.subr.mxu0 0.0
    %114 = vmatpush1.xpose.msra.mxu0 0.0
    %115 = vmatprep.subr.mxu0 0.0
    %116 = vmatpush1.xpose.msra.mxu0 0.0
    %117 = vmatprep.subr.mxu0 0.0
    %118 = vmatpush1.xpose.msra.mxu0 0.0
    %119 = vmatprep.subr.mxu0 0.0
    %120 = vmatpush1.xpose.msra.mxu0 0.0
    %121 = vmatprep.subr.mxu0 0.0
    %122 = vmatpush1.xpose.msra.mxu0 0.0
    %123 = vmatprep.subr.mxu0 0.0
    %124 = vmatpush1.xpose.msra.mxu0 0.0
    %125 = vmatprep.subr.mxu0 0.0
    %126 = vmatpush1.xpose.msra.mxu0 0.0
    %127 = vmatprep.subr.mxu0 0.0
    %128 = vmatpush1.xpose.msra.mxu0 0.0
    %129 = vmatprep.subr.mxu0 0.0
    %130 = vmatpush1.xpose.msra.mxu0 0.0
    %131 = vmatprep.subr.mxu0 0.0
    %132 = vmatpush1.xpose.msra.mxu0 0.0
    %133 = vmatprep.subr.mxu0 0.0
    %134 = vmatpush1.xpose.msra.mxu0 0.0
    %135 = vmatprep.subr.mxu0 0.0
    %136 = vmatpush1.xpose.msra.mxu0 0.0
    %137 = vmatprep.subr.mxu0 0.0
    %138 = vmatpush1.xpose.msra.mxu0 0.0
    %139 = vmatprep.subr.mxu0 0.0
    %140 = vmatpush1.xpose.msra.mxu0 0.0
    %141 = vmatprep.subr.mxu0 0.0
    %142 = vmatpush1.xpose.msra.mxu0 0.0
    %143 = vmatprep.mubr.f32.mxu0 0.0
    %144 = vmatmul.mubr.f32.gmra.mrb[0].mxu0 %v15
    %v145 = vpop.f32.mrb[0].mxu0
    %v146 = vadd.f32 0.0, %v145
    %v147 = vpop.f32.mrb[0].mxu0
    %148 = vmatprep.mubr.f32.mxu0 0.0
    %149 = vmatmul.mubr.f32.gmra.mrb[0].mxu0 %v16
    %v150 = vpop.f32.mrb[0].mxu0
    %v151 = vadd.f32 0.0, %v150
    %v152 = vpop.f32.mrb[0].mxu0
    %153 = vmatprep.mubr.f32.mxu0 0.0
    %154 = vmatmul.mubr.f32.gmra.mrb[0].mxu0 %v17
    %v155 = vpop.f32.mrb[0].mxu0
    %v156 = vadd.f32 0.0, %v155
    %v157 = vpop.f32.mrb[0].mxu0
    %158 = vmatprep.mubr.f32.mxu0 0.0
    %159 = vmatmul.mubr.f32.gmra.mrb[0].mxu0 %v18
    %v160 = vpop.f32.mrb[0].mxu0
    %v161 = vadd.f32 0.0, %v160
    %v162 = vpop.f32.mrb[0].mxu0
    %163 = vmatprep.mubr.f32.mxu0 0.0
    %164 = vmatmul.mubr.f32.gmra.mrb[0].mxu0 %v19
    %v165 = vpop.f32.mrb[0].mxu0
    %v166 = vadd.f32 0.0, %v165
    %v167 = vpop.f32.mrb[0].mxu0
    %168 = vmatprep.mubr.f32.mxu0 0.0
    %169 = vmatmul.mubr.f32.gmra.mrb[0].mxu0 %v20
    %v170 = vpop.f32.mrb[0].mxu0
    %v171 = vadd.f32 0.0, %v170
    %v172 = vpop.f32.mrb[0].mxu0
    %173 = vmatprep.mubr.f32.mxu0 0.0
    %174 = vmatmul.mubr.f32.gmra.mrb[0].mxu0 %v21
    %v175 = vpop.f32.mrb[0].mxu0
    %v176 = vadd.f32 0.0, %v175
    %v177 = vpop.f32.mrb[0].mxu0
    %178 = vmatprep.mubr.f32.mxu0 0.0
    %179 = vmatmul.mubr.f32.gmra.mrb[0].mxu0 %v22
    %v180 = vpop.f32.mrb[0].mxu0
    %v181 = vadd.f32 0.0, %v180
    %v182 = vpop.f32.mrb[0].mxu0
    %183 = vmatprep.mubr.f32.mxu0 0.0
    %184 = vmatmul.mubr.f32.gmra.mrb[0].mxu0 %v23
    %v185 = vpop.f32.mrb[0].mxu0
    %v186 = vadd.f32 0.0, %v185
    %v187 = vpop.f32.mrb[0].mxu0
    %188 = vmatprep.mubr.f32.mxu0 0.0
    %189 = vmatmul.mubr.f32.gmra.mrb[0].mxu0 %v24
    %v190 = vpop.f32.mrb[0].mxu0
    %v191 = vadd.f32 0.0, %v190
    %v192 = vpop.f32.mrb[0].mxu0
    %193 = vmatprep.mubr.f32.mxu0 0.0
    %194 = vmatmul.mubr.f32.gmra.mrb[0].mxu0 %v25
    %v195 = vpop.f32.mrb[0].mxu0
    %v196 = vadd.f32 0.0, %v195
    %v197 = vpop.f32.mrb[0].mxu0
    %198 = vmatprep.mubr.f32.mxu0 0.0
    %199 = vmatmul.mubr.f32.gmra.mrb[0].mxu0 %v26
    %v200 = vpop.f32.mrb[0].mxu0
    %v201 = vadd.f32 0.0, %v200
    %v202 = vpop.f32.mrb[0].mxu0
    %203 = vmatprep.mubr.f32.mxu0 0.0
    %204 = vmatmul.mubr.f32.gmra.mrb[0].mxu0 %v27
    %v205 = vpop.f32.mrb[0].mxu0
    %v206 = vadd.f32 0.0, %v205
    %v207 = vpop.f32.mrb[0].mxu0
    %208 = vmatprep.mubr.f32.mxu0 0.0
    %209 = vmatmul.mubr.f32.gmra.mrb[0].mxu0 %v28
    %v210 = vpop.f32.mrb[0].mxu0
    %v211 = vadd.f32 0.0, %v210
    %v212 = vpop.f32.mrb[0].mxu0
    %213 = vmatprep.mubr.f32.mxu0 0.0
    %214 = vmatmul.mubr.f32.gmra.mrb[0].mxu0 %v29
    %v215 = vpop.f32.mrb[0].mxu0
    %v216 = vadd.f32 0.0, %v215
    %v217 = vpop.f32.mrb[0].mxu0
    %218 = vmatprep.mubr.f32.mxu0 0.0
    %219 = vmatmul.mubr.f32.gmra.mrb[0].mxu0 %v30
    %v220 = vpop.f32.mrb[0].mxu0
    %v221 = vadd.f32 0.0, %v220
    %v222 = vpop.f32.mrb[0].mxu0
    %223 = vdwg.mxu0
    %224 = vxpose.xlu0.b32.start [1/16] %v48, 128
    %225 = vxpose.xlu0.b32.cont [2/16] %v50, 128
    %226 = vxpose.xlu0.b32.cont [3/16] %v52, 128
    %227 = vxpose.xlu0.b32.cont [4/16] %v54, 128
    %228 = vxpose.xlu0.b32.cont [5/16] %v56, 128
    %229 = vxpose.xlu0.b32.cont [6/16] %v58, 128
    %230 = vxpose.xlu0.b32.cont [7/16] %v60, 128
    %231 = vxpose.xlu0.b32.cont [8/16] %v62, 128
    %232 = vxpose.xlu0.b32.cont [9/16] %v64, 128
    %233 = vxpose.xlu0.b32.cont [10/16] %v66, 128
    %234 = vxpose.xlu0.b32.cont [11/16] %v68, 128
    %235 = vxpose.xlu0.b32.cont [12/16] %v70, 128
    %236 = vxpose.xlu0.b32.cont [13/16] %v72, 128
    %237 = vxpose.xlu0.b32.cont [14/16] %v74, 128
    %238 = vxpose.xlu0.b32.cont [15/16] %v76, 128
    %239 = vxpose.xlu0.b32.end [16/16] %v78, 128
    %v240 = vpop.trf.xlu0
    %v241 = vpop.trf.xlu0
    %v242 = vpop.trf.xlu0
    %v243 = vpop.trf.xlu0
    %v244 = vpop.trf.xlu0
    %v245 = vpop.trf.xlu0
    %v246 = vpop.trf.xlu0
    %v247 = vpop.trf.xlu0
    %v248 = vpop.trf.xlu0
    %v249 = vpop.trf.xlu0
    %v250 = vpop.trf.xlu0
    %v251 = vpop.trf.xlu0
    %v252 = vpop.trf.xlu0
    %v253 = vpop.trf.xlu0
    %v254 = vpop.trf.xlu0
    %v255 = vpop.trf.xlu0
    %v256 = vlaneseq
    %v257 = vshrl.u32 %v256, 7
    %v258 = vsub.s32 0, %v257
    %v259 = vrot.slane %v240, %v258
    %v260 = vadd.f32 %v48, %v259
    %v261 = vadd.f32 %v50, %v259
    %v262 = vadd.f32 %v52, %v259
    %v263 = vadd.f32 %v54, %v259
    %v264 = vadd.f32 %v56, %v259
    %v265 = vadd.f32 %v58, %v259
    %v266 = vadd.f32 %v60, %v259
    %v267 = vadd.f32 %v62, %v259
    %v268 = vadd.f32 %v64, %v259
    %v269 = vadd.f32 %v66, %v259
    %v270 = vadd.f32 %v68, %v259
    %v271 = vadd.f32 %v70, %v259
    %v272 = vadd.f32 %v72, %v259
    %v273 = vadd.f32 %v74, %v259
    %v274 = vadd.f32 %v76, %v259
    %v275 = vadd.f32 %v78, %v259
    %v276 = vmul.f32 %v146, 2.0
    %v277 = vmul.f32 %v151, 2.0
    %v278 = vmul.f32 %v156, 2.0
    %v279 = vmul.f32 %v161, 2.0
    %v280 = vmul.f32 %v166, 2.0
    %v281 = vmul.f32 %v171, 2.0
    %v282 = vmul.f32 %v176, 2.0
    %v283 = vmul.f32 %v181, 2.0
    %v284 = vmul.f32 %v186, 2.0
    %v285 = vmul.f32 %v191, 2.0
    %v286 = vmul.f32 %v196, 2.0
    %v287 = vmul.f32 %v201, 2.0
    %v288 = vmul.f32 %v206, 2.0
    %v289 = vmul.f32 %v211, 2.0
    %v290 = vmul.f32 %v216, 2.0
    %v291 = vmul.f32 %v221, 2.0
    %v292 = vsub.f32 %v260, %v276
    %v293 = vsub.f32 %v261, %v277
    %v294 = vsub.f32 %v262, %v278
    %v295 = vsub.f32 %v263, %v279
    %v296 = vsub.f32 %v264, %v280
    %v297 = vsub.f32 %v265, %v281
    %v298 = vsub.f32 %v266, %v282
    %v299 = vsub.f32 %v267, %v283
    %v300 = vsub.f32 %v268, %v284
    %v301 = vsub.f32 %v269, %v285
    %v302 = vsub.f32 %v270, %v286
    %v303 = vsub.f32 %v271, %v287
    %v304 = vsub.f32 %v272, %v288
    %v305 = vsub.f32 %v273, %v289
    %v306 = vsub.f32 %v274, %v290
    %v307 = vsub.f32 %v275, %v291
    %v308 = vmax.f32 %v292, 0.0
    %v309 = vmax.f32 %v293, 0.0
    %v310 = vmax.f32 %v294, 0.0
    %v311 = vmax.f32 %v295, 0.0
    %v312 = vmax.f32 %v296, 0.0
    %v313 = vmax.f32 %v297, 0.0
    %v314 = vmax.f32 %v298, 0.0
    %v315 = vmax.f32 %v299, 0.0
    %v316 = vmax.f32 %v300, 0.0
    %v317 = vmax.f32 %v301, 0.0
    %v318 = vmax.f32 %v302, 0.0
    %v319 = vmax.f32 %v303, 0.0
    %v320 = vmax.f32 %v304, 0.0
    %v321 = vmax.f32 %v305, 0.0
    %v322 = vmax.f32 %v306, 0.0
    %v323 = vmax.f32 %v307, 0.0
    %v324 = vld [vmem:[%s1] sm:$0xff]
    %v325 = vld [vmem:[%s1 + $0x8] sm:$0xff]
    %v326 = vld [vmem:[%s1 + $0x10] sm:$0xff]
    %v327 = vld [vmem:[%s1 + $0x18] sm:$0xff]
    %v328 = vld [vmem:[%s1 + $0x20] sm:$0xff]
    %v329 = vld [vmem:[%s1 + $0x28] sm:$0xff]
    %v330 = vld [vmem:[%s1 + $0x30] sm:$0xff]
    %v331 = vld [vmem:[%s1 + $0x38] sm:$0xff]
    %v332 = vld [vmem:[%s1 + $0x40] sm:$0xff]
    %v333 = vld [vmem:[%s1 + $0x48] sm:$0xff]
    %v334 = vld [vmem:[%s1 + $0x50] sm:$0xff]
    %v335 = vld [vmem:[%s1 + $0x58] sm:$0xff]
    %v336 = vld [vmem:[%s1 + $0x60] sm:$0xff]
    %v337 = vld [vmem:[%s1 + $0x68] sm:$0xff]
    %v338 = vld [vmem:[%s1 + $0x70] sm:$0xff]
    %v339 = vld [vmem:[%s1 + $0x78] sm:$0xff]
    %340 = vxpose.xlu0.b32.start [1/16] %v324, 128
    %341 = vxpose.xlu0.b32.cont [2/16] %v325, 128
    %342 = vxpose.xlu0.b32.cont [3/16] %v326, 128
    %343 = vxpose.xlu0.b32.cont [4/16] %v327, 128
    %344 = vxpose.xlu0.b32.cont [5/16] %v328, 128
    %345 = vxpose.xlu0.b32.cont [6/16] %v329, 128
    %346 = vxpose.xlu0.b32.cont [7/16] %v330, 128
    %347 = vxpose.xlu0.b32.cont [8/16] %v331, 128
    %348 = vxpose.xlu0.b32.cont [9/16] %v332, 128
    %349 = vxpose.xlu0.b32.cont [10/16] %v333, 128
    %350 = vxpose.xlu0.b32.cont [11/16] %v334, 128
    %351 = vxpose.xlu0.b32.cont [12/16] %v335, 128
    %352 = vxpose.xlu0.b32.cont [13/16] %v336, 128
    %353 = vxpose.xlu0.b32.cont [14/16] %v337, 128
    %354 = vxpose.xlu0.b32.cont [15/16] %v338, 128
    %355 = vxpose.xlu0.b32.end [16/16] %v339, 128
    %v356 = vpop.trf.xlu0
    %v357 = vpop.trf.xlu0
    %v358 = vpop.trf.xlu0
    %v359 = vpop.trf.xlu0
    %v360 = vpop.trf.xlu0
    %v361 = vpop.trf.xlu0
    %v362 = vpop.trf.xlu0
    %v363 = vpop.trf.xlu0
    %v364 = vpop.trf.xlu0
    %v365 = vpop.trf.xlu0
    %v366 = vpop.trf.xlu0
    %v367 = vpop.trf.xlu0
    %v368 = vpop.trf.xlu0
    %v369 = vpop.trf.xlu0
    %v370 = vpop.trf.xlu0
    %v371 = vpop.trf.xlu0
    %372 = vset.pattern.permute.xlu0 0
    %373 = vperm.xlu0 %372, %v324
    %v374 = vpop.permute.xlu0 %373
    %375 = vset.pattern.permute.xlu0 0
    %376 = vperm.xlu0 %375, %v325
    %v377 = vpop.permute.xlu0 %376
    %378 = vset.pattern.permute.xlu0 0
    %379 = vperm.xlu0 %378, %v326
    %v380 = vpop.permute.xlu0 %379
    %381 = vset.pattern.permute.xlu0 0
    %382 = vperm.xlu0 %381, %v327
    %v383 = vpop.permute.xlu0 %382
    %384 = vset.pattern.permute.xlu0 0
    %385 = vperm.xlu0 %384, %v328
    %v386 = vpop.permute.xlu0 %385
    %387 = vset.pattern.permute.xlu0 0
    %388 = vperm.xlu0 %387, %v329
    %v389 = vpop.permute.xlu0 %388
    %390 = vset.pattern.permute.xlu0 0
    %391 = vperm.xlu0 %390, %v330
    %v392 = vpop.permute.xlu0 %391
    %393 = vset.pattern.permute.xlu0 0
    %394 = vperm.xlu0 %393, %v331
    %v395 = vpop.permute.xlu0 %394
    %396 = vset.pattern.permute.xlu0 0
    %397 = vperm.xlu0 %396, %v332
    %v398 = vpop.permute.xlu0 %397
    %399 = vset.pattern.permute.xlu0 0
    %400 = vperm.xlu0 %399, %v333
    %v401 = vpop.permute.xlu0 %400
    %402 = vset.pattern.permute.xlu0 0
    %403 = vperm.xlu0 %402, %v334
    %v404 = vpop.permute.xlu0 %403
    %405 = vset.pattern.permute.xlu0 0
    %406 = vperm.xlu0 %405, %v335
    %v407 = vpop.permute.xlu0 %406
    %408 = vset.pattern.permute.xlu0 0
    %409 = vperm.xlu0 %408, %v336
    %v410 = vpop.permute.xlu0 %409
    %411 = vset.pattern.permute.xlu0 0
    %412 = vperm.xlu0 %411, %v337
    %v413 = vpop.permute.xlu0 %412
    %414 = vset.pattern.permute.xlu0 0
    %415 = vperm.xlu0 %414, %v338
    %v416 = vpop.permute.xlu0 %415
    %417 = vset.pattern.permute.xlu0 0
    %418 = vperm.xlu0 %417, %v339
    %v419 = vpop.permute.xlu0 %418
    %v420 = vlaneseq
    %v421 = vshrl.u32 %v420, 7
    %v422 = vsub.s32 0, %v421
    %v423 = vrot.slane %v356, %v422
    %vm424 = vcmp.eq.s32.totalorder %v374, %v423
    %vm425 = vcmp.eq.s32.totalorder %v377, %v423
    %vm426 = vcmp.eq.s32.totalorder %v380, %v423
    %vm427 = vcmp.eq.s32.totalorder %v383, %v423
    %vm428 = vcmp.eq.s32.totalorder %v386, %v423
    %vm429 = vcmp.eq.s32.totalorder %v389, %v423
    %vm430 = vcmp.eq.s32.totalorder %v392, %v423
    %vm431 = vcmp.eq.s32.totalorder %v395, %v423
    %vm432 = vcmp.eq.s32.totalorder %v398, %v423
    %vm433 = vcmp.eq.s32.totalorder %v401, %v423
    %vm434 = vcmp.eq.s32.totalorder %v404, %v423
    %vm435 = vcmp.eq.s32.totalorder %v407, %v423
    %vm436 = vcmp.eq.s32.totalorder %v410, %v423
    %vm437 = vcmp.eq.s32.totalorder %v413, %v423
    %vm438 = vcmp.eq.s32.totalorder %v416, %v423
    %vm439 = vcmp.eq.s32.totalorder %v419, %v423
    %v440 = vlaneseq
    %v441 = vshrl.u32 %v440, 7
    %v442 = vadd.s32 %v441, 8
    %v443 = vadd.s32 %v441, 16
    %v444 = vadd.s32 %v441, 24
    %v445 = vadd.s32 %v441, 32
    %v446 = vadd.s32 %v441, 40
    %v447 = vadd.s32 %v441, 48
    %v448 = vadd.s32 %v441, 56
    %v449 = vadd.s32 %v441, 64
    %v450 = vadd.s32 %v441, 72
    %v451 = vadd.s32 %v441, 80
    %v452 = vadd.s32 %v441, 88
    %v453 = vadd.s32 %v441, 96
    %v454 = vadd.s32 %v441, 104
    %v455 = vadd.s32 %v441, 112
    %v456 = vadd.s32 %v441, 120
    %v457 = vlaneseq
    %v458 = vand.u32 %v457, 127
    %vm459 = vcmp.lt.s32.totalorder %v441, 8
    %vm460 = vcmp.lt.s32.totalorder %v442, 8
    %vm461 = vcmp.lt.s32.totalorder %v443, 8
    %vm462 = vcmp.lt.s32.totalorder %v444, 8
    %vm463 = vcmp.lt.s32.totalorder %v445, 8
    %vm464 = vcmp.lt.s32.totalorder %v446, 8
    %vm465 = vcmp.lt.s32.totalorder %v447, 8
    %vm466 = vcmp.lt.s32.totalorder %v448, 8
    %vm467 = vcmp.lt.s32.totalorder %v449, 8
    %vm468 = vcmp.lt.s32.totalorder %v450, 8
    %vm469 = vcmp.lt.s32.totalorder %v451, 8
    %vm470 = vcmp.lt.s32.totalorder %v452, 8
    %vm471 = vcmp.lt.s32.totalorder %v453, 8
    %vm472 = vcmp.lt.s32.totalorder %v454, 8
    %vm473 = vcmp.lt.s32.totalorder %v455, 8
    %vm474 = vcmp.lt.s32.totalorder %v456, 8
    %vm475 = vcmp.lt.s32.totalorder %v458, 8
    %v476 = vsel %vm459, 1, 0
    %v477 = vsel %vm460, 1, 0
    %v478 = vsel %vm461, 1, 0
    %v479 = vsel %vm462, 1, 0
    %v480 = vsel %vm463, 1, 0
    %v481 = vsel %vm464, 1, 0
    %v482 = vsel %vm465, 1, 0
    %v483 = vsel %vm466, 1, 0
    %v484 = vsel %vm467, 1, 0
    %v485 = vsel %vm468, 1, 0
    %v486 = vsel %vm469, 1, 0
    %v487 = vsel %vm470, 1, 0
    %v488 = vsel %vm471, 1, 0
    %v489 = vsel %vm472, 1, 0
    %v490 = vsel %vm473, 1, 0
    %v491 = vsel %vm474, 1, 0
    %vm492 = vcmp.eq.s32.totalorder %v476, 1
    %vm493 = vcmp.eq.s32.totalorder %v477, 1
    %vm494 = vcmp.eq.s32.totalorder %v478, 1
    %vm495 = vcmp.eq.s32.totalorder %v479, 1
    %vm496 = vcmp.eq.s32.totalorder %v480, 1
    %vm497 = vcmp.eq.s32.totalorder %v481, 1
    %vm498 = vcmp.eq.s32.totalorder %v482, 1
    %vm499 = vcmp.eq.s32.totalorder %v483, 1
    %vm500 = vcmp.eq.s32.totalorder %v484, 1
    %vm501 = vcmp.eq.s32.totalorder %v485, 1
    %vm502 = vcmp.eq.s32.totalorder %v486, 1
    %vm503 = vcmp.eq.s32.totalorder %v487, 1
    %vm504 = vcmp.eq.s32.totalorder %v488, 1
    %vm505 = vcmp.eq.s32.totalorder %v489, 1
    %vm506 = vcmp.eq.s32.totalorder %v490, 1
    %vm507 = vcmp.eq.s32.totalorder %v491, 1
    %v508 = vsel %vm475, 1, 0
    %vm509 = vcmp.eq.s32.totalorder %v508, 1
    %vm510 = vmand %vm492, %vm509
    %vm511 = vmand %vm493, %vm509
    %vm512 = vmand %vm494, %vm509
    %vm513 = vmand %vm495, %vm509
    %vm514 = vmand %vm496, %vm509
    %vm515 = vmand %vm497, %vm509
    %vm516 = vmand %vm498, %vm509
    %vm517 = vmand %vm499, %vm509
    %vm518 = vmand %vm500, %vm509
    %vm519 = vmand %vm501, %vm509
    %vm520 = vmand %vm502, %vm509
    %vm521 = vmand %vm503, %vm509
    %vm522 = vmand %vm504, %vm509
    %vm523 = vmand %vm505, %vm509
    %vm524 = vmand %vm506, %vm509
    %vm525 = vmand %vm507, %vm509
    %vm526 = vcmp.ne.s32.totalorder %v441, %v458
    %vm527 = vcmp.ne.s32.totalorder %v442, %v458
    %vm528 = vcmp.ne.s32.totalorder %v443, %v458
    %vm529 = vcmp.ne.s32.totalorder %v444, %v458
    %vm530 = vcmp.ne.s32.totalorder %v445, %v458
    %vm531 = vcmp.ne.s32.totalorder %v446, %v458
    %vm532 = vcmp.ne.s32.totalorder %v447, %v458
    %vm533 = vcmp.ne.s32.totalorder %v448, %v458
    %vm534 = vcmp.ne.s32.totalorder %v449, %v458
    %vm535 = vcmp.ne.s32.totalorder %v450, %v458
    %vm536 = vcmp.ne.s32.totalorder %v451, %v458
    %vm537 = vcmp.ne.s32.totalorder %v452, %v458
    %vm538 = vcmp.ne.s32.totalorder %v453, %v458
    %vm539 = vcmp.ne.s32.totalorder %v454, %v458
    %vm540 = vcmp.ne.s32.totalorder %v455, %v458
    %vm541 = vcmp.ne.s32.totalorder %v456, %v458
    %vm542 = vmand %vm424, %vm526
    %vm543 = vmand %vm425, %vm527
    %vm544 = vmand %vm426, %vm528
    %vm545 = vmand %vm427, %vm529
    %vm546 = vmand %vm428, %vm530
    %vm547 = vmand %vm429, %vm531
    %vm548 = vmand %vm430, %vm532
    %vm549 = vmand %vm431, %vm533
    %vm550 = vmand %vm432, %vm534
    %vm551 = vmand %vm433, %vm535
    %vm552 = vmand %vm434, %vm536
    %vm553 = vmand %vm435, %vm537
    %vm554 = vmand %vm436, %vm538
    %vm555 = vmand %vm437, %vm539
    %vm556 = vmand %vm438, %vm540
    %vm557 = vmand %vm439, %vm541
    %vm558 = vmand %vm542, %vm510
    %vm559 = vmand %vm543, %vm511
    %vm560 = vmand %vm544, %vm512
    %vm561 = vmand %vm545, %vm513
    %vm562 = vmand %vm546, %vm514
    %vm563 = vmand %vm547, %vm515
    %vm564 = vmand %vm548, %vm516
    %vm565 = vmand %vm549, %vm517
    %vm566 = vmand %vm550, %vm518
    %vm567 = vmand %vm551, %vm519
    %vm568 = vmand %vm552, %vm520
    %vm569 = vmand %vm553, %vm521
    %vm570 = vmand %vm554, %vm522
    %vm571 = vmand %vm555, %vm523
    %vm572 = vmand %vm556, %vm524
    %vm573 = vmand %vm557, %vm525
    %vm574 = vmxor %vm424, 1
    %vm575 = vmxor %vm425, 1
    %vm576 = vmxor %vm426, 1
    %vm577 = vmxor %vm427, 1
    %vm578 = vmxor %vm428, 1
    %vm579 = vmxor %vm429, 1
    %vm580 = vmxor %vm430, 1
    %vm581 = vmxor %vm431, 1
    %vm582 = vmxor %vm432, 1
    %vm583 = vmxor %vm433, 1
    %vm584 = vmxor %vm434, 1
    %vm585 = vmxor %vm435, 1
    %vm586 = vmxor %vm436, 1
    %vm587 = vmxor %vm437, 1
    %vm588 = vmxor %vm438, 1
    %vm589 = vmxor %vm439, 1
    %vm590 = vmand %vm574, %vm510
    %vm591 = vmand %vm575, %vm511
    %vm592 = vmand %vm576, %vm512
    %vm593 = vmand %vm577, %vm513
    %vm594 = vmand %vm578, %vm514
    %vm595 = vmand %vm579, %vm515
    %vm596 = vmand %vm580, %vm516
    %vm597 = vmand %vm581, %vm517
    %vm598 = vmand %vm582, %vm518
    %vm599 = vmand %vm583, %vm519
    %vm600 = vmand %vm584, %vm520
    %vm601 = vmand %vm585, %vm521
    %vm602 = vmand %vm586, %vm522
    %vm603 = vmand %vm587, %vm523
    %vm604 = vmand %vm588, %vm524
    %vm605 = vmand %vm589, %vm525
    %v606 = vadd.f32 %v308, 0.2
    %v607 = vadd.f32 %v309, 0.2
    %v608 = vadd.f32 %v310, 0.2
    %v609 = vadd.f32 %v311, 0.2
    %v610 = vadd.f32 %v312, 0.2
    %v611 = vadd.f32 %v313, 0.2
    %v612 = vadd.f32 %v314, 0.2
    %v613 = vadd.f32 %v315, 0.2
    %v614 = vadd.f32 %v316, 0.2
    %v615 = vadd.f32 %v317, 0.2
    %v616 = vadd.f32 %v318, 0.2
    %v617 = vadd.f32 %v319, 0.2
    %v618 = vadd.f32 %v320, 0.2
    %v619 = vadd.f32 %v321, 0.2
    %v620 = vadd.f32 %v322, 0.2
    %v621 = vadd.f32 %v323, 0.2
    %v622 = vsel %vm558, %v606, -inf
    %v623 = vsel %vm559, %v607, -inf
    %v624 = vsel %vm560, %v608, -inf
    %v625 = vsel %vm561, %v609, -inf
    %v626 = vsel %vm562, %v610, -inf
    %v627 = vsel %vm563, %v611, -inf
    %v628 = vsel %vm564, %v612, -inf
    %v629 = vsel %vm565, %v613, -inf
    %v630 = vsel %vm566, %v614, -inf
    %v631 = vsel %vm567, %v615, -inf
    %v632 = vsel %vm568, %v616, -inf
    %v633 = vsel %vm569, %v617, -inf
    %v634 = vsel %vm570, %v618, -inf
    %v635 = vsel %vm571, %v619, -inf
    %v636 = vsel %vm572, %v620, -inf
    %v637 = vsel %vm573, %v621, -inf
    %638 = vst [vmem:[#allocation2] sm:$0xff] %v622
    %639 = vst [vmem:[#allocation2 + $0x8] sm:$0xff] %v623
    %640 = vst [vmem:[#allocation2 + $0x10] sm:$0xff] %v624
    %641 = vst [vmem:[#allocation2 + $0x18] sm:$0xff] %v625
    %642 = vst [vmem:[#allocation2 + $0x20] sm:$0xff] %v626
    %643 = vst [vmem:[#allocation2 + $0x28] sm:$0xff] %v627
    %644 = vst [vmem:[#allocation2 + $0x30] sm:$0xff] %v628
    %645 = vst [vmem:[#allocation2 + $0x38] sm:$0xff] %v629
    %646 = vst [vmem:[#allocation2 + $0x40] sm:$0xff] %v630
    %647 = vst [vmem:[#allocation2 + $0x48] sm:$0xff] %v631
    %648 = vst [vmem:[#allocation2 + $0x50] sm:$0xff] %v632
    %649 = vst [vmem:[#allocation2 + $0x58] sm:$0xff] %v633
    %650 = vst [vmem:[#allocation2 + $0x60] sm:$0xff] %v634
    %651 = vst [vmem:[#allocation2 + $0x68] sm:$0xff] %v635
    %652 = vst [vmem:[#allocation2 + $0x70] sm:$0xff] %v636
    %653 = vst [vmem:[#allocation2 + $0x78] sm:$0xff] %v637
    %v654 = vsel %vm590, %v308, inf
    %v655 = vsel %vm591, %v309, inf
    %v656 = vsel %vm592, %v310, inf
    %v657 = vsel %vm593, %v311, inf
    %v658 = vsel %vm594, %v312, inf
    %v659 = vsel %vm595, %v313, inf
    %v660 = vsel %vm596, %v314, inf
    %v661 = vsel %vm597, %v315, inf
    %v662 = vsel %vm598, %v316, inf
    %v663 = vsel %vm599, %v317, inf
    %v664 = vsel %vm600, %v318, inf
    %v665 = vsel %vm601, %v319, inf
    %v666 = vsel %vm602, %v320, inf
    %v667 = vsel %vm603, %v321, inf
    %v668 = vsel %vm604, %v322, inf
    %v669 = vsel %vm605, %v323, inf
    %670 = vst [vmem:[#allocation4] sm:$0xff] %v654
    %671 = vst [vmem:[#allocation4 + $0x8] sm:$0xff] %v655
    %672 = vst [vmem:[#allocation4 + $0x10] sm:$0xff] %v656
    %673 = vst [vmem:[#allocation4 + $0x18] sm:$0xff] %v657
    %674 = vst [vmem:[#allocation4 + $0x20] sm:$0xff] %v658
    %675 = vst [vmem:[#allocation4 + $0x28] sm:$0xff] %v659
    %676 = vst [vmem:[#allocation4 + $0x30] sm:$0xff] %v660
    %677 = vst [vmem:[#allocation4 + $0x38] sm:$0xff] %v661
    %678 = vst [vmem:[#allocation4 + $0x40] sm:$0xff] %v662
    %679 = vst [vmem:[#allocation4 + $0x48] sm:$0xff] %v663
    %680 = vst [vmem:[#allocation4 + $0x50] sm:$0xff] %v664
    %681 = vst [vmem:[#allocation4 + $0x58] sm:$0xff] %v665
    %682 = vst [vmem:[#allocation4 + $0x60] sm:$0xff] %v666
    %683 = vst [vmem:[#allocation4 + $0x68] sm:$0xff] %v667
    %684 = vst [vmem:[#allocation4 + $0x70] sm:$0xff] %v668
    %685 = vst [vmem:[#allocation4 + $0x78] sm:$0xff] %v669
    // Predicated region
    $region10: #{tpu_custom_call.1} parent=1 // pred_check
      _
    $region11: #{tpu_custom_call.1} parent=1 // pred_check_branch
      %687 = sbr.rel (0) target = $region13
    $region12: #{tpu_custom_call.1} parent=1 // pred_region
      %s689 = ssub.s32 2048, 2048
      %690 = vsyncadd [#allocation3], %s689
      %s691 = sshll.u32 [#allocation2], 4
      %s692 = int_to_ptr.vmem [resolvable:$true] %s691
      %697 = dma.vmem_to_hbm [thread:$0]  %s692, 2048, %s2, [#allocation3], 128, 128, 8
    $region13: #{tpu_custom_call.1} parent=1 // pred_fallthru
      _
    // Predicated region
    $region14: #{tpu_custom_call.1} parent=1 // pred_check
      _
    $region15: #{tpu_custom_call.1} parent=1 // pred_check_branch
      %699 = sbr.rel (0) target = $region17
    $region16: #{tpu_custom_call.1} parent=1 // pred_region
      %s701 = ssub.s32 2048, 2048
      %702 = vsyncadd [#allocation5], %s701
      %s703 = sshll.u32 [#allocation4], 4
      %s704 = int_to_ptr.vmem [resolvable:$true] %s703
      %709 = dma.vmem_to_hbm [thread:$0]  %s704, 2048, %s3, [#allocation5], 128, 128, 8
    $region17: #{tpu_custom_call.1} parent=1 // pred_fallthru
      _
    // Predicated region
    $region18: #{tpu_custom_call.1} parent=1 // pred_check
      _
    $region19: #{tpu_custom_call.1} parent=1 // pred_check_branch
      %711 = sbr.rel (0) target = $region21
    $region20: #{tpu_custom_call.1} parent=1 // pred_region
      %712 = dma.done [#allocation3], 2048
    $region21: #{tpu_custom_call.1} parent=1 // pred_fallthru
      _
    // Predicated region
    $region22: #{tpu_custom_call.1} parent=1 // pred_check
      _
    $region23: #{tpu_custom_call.1} parent=1 // pred_check_branch
      %714 = sbr.rel (0) target = $region25
    $region24: #{tpu_custom_call.1} parent=1 // pred_region
      %715 = dma.done [#allocation5], 2048
    $region25: #{tpu_custom_call.1} parent=1 // pred_fallthru
      _
    %716 = vsyncpa [#allocation3], 1
    %717 = vsyncpa [#allocation5], 1

</llo_original>
